<compile_context>
chip_gen: v7x
topology: tpu7x:2x2x1
jax: 0.10.0
libtpu: 0.0.40
codegen_flags: <defaults>
</compile_context>

<pallas_src>
import jax
import jax.numpy as jnp
from jax.experimental import pallas as pl
from jax.experimental.pallas import tpu as pltpu


_TARGET_BLOCK_BYTES = 4 << 20   # ~4 MiB per block (perf review: 2-4 MiB sweet spot)
_VMEM_LIMIT_BYTES = 32 << 20    # <= physical VMEM on v5e/v6e (128 MiB) and v7x (64 MiB)


def _relu6(x):
    return jnp.minimum(jnp.maximum(x, 0.0), 6.0)


def _fused_forward(x2, x3):
    """Main path: C is a multiple of 8 -> dense sublane channel tiling."""
    n, c, h, w = x2.shape
    hw = h * w
    itemsize = jnp.dtype(x2.dtype).itemsize
    c_out = 2 * c + 1

    # Lane-dense flat spatial view (free reshape, NCHW is already contiguous).
    x2v = x2.reshape(n, c, hw)
    x3v = x3.reshape(n, c, hw)

    # --- tile selection --------------------------------------------------
    # Channel tile: largest multiple-of-8 divisor of C with block <= ~4 MiB.
    tc = 8
    for d in range(c, 7, -1):
        if c % d == 0 and d % 8 == 0 and d * hw * itemsize <= _TARGET_BLOCK_BYTES:
            tc = d
            break
    # Batch tile: grow the block further when C*H*W is small (tiny shapes),
    # so each grid step still moves a sizeable slab.
    tb = 1
    for d in range(n, 0, -1):
        if n % d == 0 and d * tc * hw * itemsize <= _TARGET_BLOCK_BYTES:
            tb = d
            break

    nb = c // tc                 # channel blocks per input tensor
    G = 2 * nb + 1               # total grid steps along the schedule axis

    # --- scalar-prefetched schedule tables (SMEM, drive the index_maps) ---
    # step 0      : out block 0        <- x2 block 0
    # step 1      : out block 2*nb     <- x2 block 0   (extra channel; DMA skipped)
    # steps 2..nb : out block 1..nb-1  <- x2 block 1..nb-1
    # steps nb+1..: out block nb..2nb-1<- x3 block 0..nb-1
    # The "inactive" source holds its last block index so Pallas never re-DMAs it.
    out_blk = jnp.asarray([0, 2 * nb] + list(range(1, nb)) + list(range(nb, 2 * nb)),
                          dtype=jnp.int32)
    x2_blk = jnp.asarray([0, 0] + list(range(1, nb)) + [nb - 1] * nb, dtype=jnp.int32)
    x3_blk = jnp.asarray([0, 0] + [0] * (nb - 1) + list(range(nb)), dtype=jnp.int32)

    def kernel(oblk_ref, b2_ref, b3_ref, x2_ref, x3_ref, o_ref):
        # oblk/b2/b3 are only consumed by the index_maps; source selection is
        # a compile-time-constant comparison against nb (no SMEM sel table).
        g = pl.program_id(1)

        @pl.when(g <= nb)        # x2 phase (includes the appended first channel)
        def _():
            o_ref[...] = _relu6(x2_ref[...])

        @pl.when(g > nb)         # x3 phase
        def _():
            o_ref[...] = _relu6(x3_ref[...])

    blk = (tb, tc, hw)
    out_numel = n * c_out * hw
    cost = pl.CostEstimate(
        flops=2 * out_numel,
        transcendentals=0,
        bytes_accessed=(2 * n * c * hw + out_numel) * itemsize,
    )

    out = pl.pallas_call(
        kernel,
        out_shape=jax.ShapeDtypeStruct((n, c_out, hw), x2.dtype),
        grid_spec=pltpu.PrefetchScalarGridSpec(
            num_scalar_prefetch=3,
            grid=(n // tb, G),
            in_specs=[
                pl.BlockSpec(blk, lambda b, g, oblk, b2, b3: (b, b2[g], 0)),
                pl.BlockSpec(blk, lambda b, g, oblk, b2, b3: (b, b3[g], 0)),
            ],
            out_specs=pl.BlockSpec(blk, lambda b, g, oblk, b2, b3: (b, oblk[g], 0)),
        ),
        compiler_params=pltpu.CompilerParams(
            dimension_semantics=("parallel", "parallel"),
            vmem_limit_bytes=_VMEM_LIMIT_BYTES,
        ),
        cost_estimate=cost,
    )(out_blk, x2_blk, x3_blk, x2v, x3v)

    return out.reshape(n, c_out, h, w)


def _fallback_forward(x2, x3):
    """Fallback for channel counts not divisible by 8: full-channel blocks per
    batch element, concat done inside the kernel (only taken for small/awkward
    shapes, where everything fits comfortably in VMEM)."""
    n, c, h, w = x2.shape
    hw = h * w
    itemsize = jnp.dtype(x2.dtype).itemsize
    c_out = 2 * c + 1

    x2v = x2.reshape(n, c, hw)
    x3v = x3.reshape(n, c, hw)

    def kernel(x2_ref, x3_ref, o_ref):
        r2 = _relu6(x2_ref[...])
        o_ref[:, 0:c, :] = r2
        o_ref[:, c:2 * c, :] = _relu6(x3_ref[...])
        o_ref[:, 2 * c:2 * c + 1, :] = r2[:, 0:1, :]

    per_step_bytes = (4 * c + 1) * hw * itemsize     # 2 inputs + 1 output block
    vmem_limit = max(_VMEM_LIMIT_BYTES, int(2.5 * per_step_bytes))

    out = pl.pallas_call(
        kernel,
        out_shape=jax.ShapeDtypeStruct((n, c_out, hw), x2.dtype),
        grid_spec=pltpu.PrefetchScalarGridSpec(
            num_scalar_prefetch=0,
            grid=(n,),
            in_specs=[
                pl.BlockSpec((1, c, hw), lambda b: (b, 0, 0)),
                pl.BlockSpec((1, c, hw), lambda b: (b, 0, 0)),
            ],
            out_specs=pl.BlockSpec((1, c_out, hw), lambda b: (b, 0, 0)),
        ),
        compiler_params=pltpu.CompilerParams(
            dimension_semantics=("parallel",),
            vmem_limit_bytes=vmem_limit,
        ),
    )(x2v, x3v)

    return out.reshape(n, c_out, h, w)


@jax.jit
def model_forward(x2, x3):
    """relu6(cat([x2, x3, x2[:, :1]], dim=1)) in one fused Pallas pass."""
    assert x2.shape == x3.shape and x2.dtype == x3.dtype
    _, c, _, _ = x2.shape
    if c % 8 == 0:
        return _fused_forward(x2, x3)
    return _fallback_forward(x2, x3)


if __name__ == "__main__":
    # Small shapes consistent with the module (original was (1, 32, 128, 128)).
    N, C, H, W = 2, 8, 16, 16
    key = jax.random.PRNGKey(0)
    k2, k3 = jax.random.split(key)
    x2 = jax.random.normal(k2, (N, C, H, W), dtype=jnp.float32)
    x3 = jax.random.normal(k3, (N, C, H, W), dtype=jnp.float32)

    out = jax.block_until_ready(model_forward(x2, x3))

    # Reference check in plain JAX.
    v1 = jnp.concatenate([x2, x3], axis=1)
    ref = jnp.clip(jnp.concatenate([v1, v1[:, 0:1]], axis=1), 0.0, 6.0)
    assert out.shape == (N, 2 * C + 1, H, W)
    assert jnp.allclose(out, ref, atol=0.0, rtol=0.0)

    print("KERNEL_OK")
</pallas_src>

<mosaic_0001>
module attributes {stable_mosaic.version = 11 : i64} {
  func.func @kernel(%arg0: i32, %arg1: i32, %arg2: memref<3xi32, #tpu.memory_space<smem>>, %arg3: memref<3xi32, #tpu.memory_space<smem>>, %arg4: memref<3xi32, #tpu.memory_space<smem>>, %arg5: memref<2x8x256xf32, #tpu.memory_space<vmem>>, %arg6: memref<2x8x256xf32, #tpu.memory_space<vmem>>, %arg7: memref<2x8x256xf32, #tpu.memory_space<vmem>>) attributes {dimension_semantics = [#tpu.dimension_semantics<parallel>, #tpu.dimension_semantics<parallel>], iteration_bounds = array<i64: 1, 3>, scalar_prefetch = 3 : i64, scratch_operands = 0 : i64, tpu.core_type = #tpu.core_type<tc>, window_params = [{transform_indices = @transform_0, window_bounds = array<i64: 2, 8, 256>}, {transform_indices = @transform_1, window_bounds = array<i64: 2, 8, 256>}, {transform_indices = @transform_2, window_bounds = array<i64: 2, 8, 256>}]} {
    %c1_i32 = arith.constant 1 : i32
    %0 = arith.cmpi sle, %arg1, %c1_i32 : i32
    %1 = arith.extui %0 : i1 to i32
    %c0_i32 = arith.constant 0 : i32
    %2 = arith.cmpi ne, %1, %c0_i32 : i32
    scf.if %2 {
      %c0 = arith.constant 0 : index
      %c0_2 = arith.constant 0 : index
      %c0_3 = arith.constant 0 : index
      %6 = vector.load %arg5[%c0, %c0_2, %c0_3] : memref<2x8x256xf32, #tpu.memory_space<vmem>>, vector<2x8x256xf32>
      %cst = arith.constant 0.000000e+00 : f32
      %7 = vector.broadcast %cst : f32 to vector<2x8x256xf32>
      %8 = arith.maximumf %6, %7 : vector<2x8x256xf32>
      %cst_4 = arith.constant 6.000000e+00 : f32
      %9 = vector.broadcast %cst_4 : f32 to vector<2x8x256xf32>
      %10 = arith.minimumf %8, %9 : vector<2x8x256xf32>
      %c0_5 = arith.constant 0 : index
      %c0_6 = arith.constant 0 : index
      %c0_7 = arith.constant 0 : index
      %11 = vector.load %arg7[%c0_5, %c0_6, %c0_7] : memref<2x8x256xf32, #tpu.memory_space<vmem>>, vector<2x8x256xf32>
      tpu.vector_store %arg7[%c0_5, %c0_6, %c0_7], %10 {strides = array<i32>} : memref<2x8x256xf32, #tpu.memory_space<vmem>>, vector<2x8x256xf32>,
    } else {
    }
    %c1_i32_0 = arith.constant 1 : i32
    %3 = arith.cmpi sgt, %arg1, %c1_i32_0 : i32
    %4 = arith.extui %3 : i1 to i32
    %c0_i32_1 = arith.constant 0 : i32
    %5 = arith.cmpi ne, %4, %c0_i32_1 : i32
    scf.if %5 {
      %c0 = arith.constant 0 : index
      %c0_2 = arith.constant 0 : index
      %c0_3 = arith.constant 0 : index
      %6 = vector.load %arg6[%c0, %c0_2, %c0_3] : memref<2x8x256xf32, #tpu.memory_space<vmem>>, vector<2x8x256xf32>
      %cst = arith.constant 0.000000e+00 : f32
      %7 = vector.broadcast %cst : f32 to vector<2x8x256xf32>
      %8 = arith.maximumf %6, %7 : vector<2x8x256xf32>
      %cst_4 = arith.constant 6.000000e+00 : f32
      %9 = vector.broadcast %cst_4 : f32 to vector<2x8x256xf32>
      %10 = arith.minimumf %8, %9 : vector<2x8x256xf32>
      %c0_5 = arith.constant 0 : index
      %c0_6 = arith.constant 0 : index
      %c0_7 = arith.constant 0 : index
      %11 = vector.load %arg7[%c0_5, %c0_6, %c0_7] : memref<2x8x256xf32, #tpu.memory_space<vmem>>, vector<2x8x256xf32>
      tpu.vector_store %arg7[%c0_5, %c0_6, %c0_7], %10 {strides = array<i32>} : memref<2x8x256xf32, #tpu.memory_space<vmem>>, vector<2x8x256xf32>,
    } else {
    }
    return
  }
  func.func @transform_0(%arg0: i32, %arg1: i32, %arg2: memref<3xi32, #tpu.memory_space<smem>>, %arg3: memref<3xi32, #tpu.memory_space<smem>>, %arg4: memref<3xi32, #tpu.memory_space<smem>>) -> (i32, i32, i32) {
    %0 = arith.index_cast %arg1 : i32 to index
    %1 = memref.load %arg3[%0] : memref<3xi32, #tpu.memory_space<smem>>
    %c0_i32 = arith.constant 0 : i32
    %c0_i32_0 = arith.constant 0 : i32
    return %arg0, %1, %c0_i32 : i32, i32, i32
  }
  func.func @transform_1(%arg0: i32, %arg1: i32, %arg2: memref<3xi32, #tpu.memory_space<smem>>, %arg3: memref<3xi32, #tpu.memory_space<smem>>, %arg4: memref<3xi32, #tpu.memory_space<smem>>) -> (i32, i32, i32) {
    %0 = arith.index_cast %arg1 : i32 to index
    %1 = memref.load %arg4[%0] : memref<3xi32, #tpu.memory_space<smem>>
    %c0_i32 = arith.constant 0 : i32
    %c0_i32_0 = arith.constant 0 : i32
    return %arg0, %1, %c0_i32 : i32, i32, i32
  }
  func.func @transform_2(%arg0: i32, %arg1: i32, %arg2: memref<3xi32, #tpu.memory_space<smem>>, %arg3: memref<3xi32, #tpu.memory_space<smem>>, %arg4: memref<3xi32, #tpu.memory_space<smem>>) -> (i32, i32, i32) {
    %0 = arith.index_cast %arg1 : i32 to index
    %1 = memref.load %arg2[%0] : memref<3xi32, #tpu.memory_space<smem>>
    %c0_i32 = arith.constant 0 : i32
    %c0_i32_0 = arith.constant 0 : i32
    return %arg0, %1, %c0_i32 : i32, i32, i32
  }
}

</mosaic_0001>

<llo_original>
// kernel: model_forward.1
$region0: #{model_forward.1}
  #allocation0 [shape = 'u32[]', space=smem, size = 0x4, offset = 0x4, fixed_abs, tag = 'smem constant byte address 0x4 - core index']
  #allocation1 [shape = 'u32[144,128]{1,0:T(1,128)}', space=vmem, size = 0x12000, scoped, tag = 'internal scratch']
  #allocation2 [shape = 's32[1]{0}', space=sflag, size = 0x4, scoped, tag = 'scoped memory for model_forward.1']
  #allocation3 [shape = 'u8[512]{0}', space=smem, size = 0x200, scoped, tag = 'prefetched SMEM operand 0']
  #allocation4 [shape = 'u8[512]{0}', space=smem, size = 0x200, scoped, tag = 'prefetched SMEM operand 1']
  #allocation5 [shape = 'u8[512]{0}', space=smem, size = 0x200, scoped, tag = 'prefetched SMEM operand 2']
  %s0 = inlined_call_operand.vmem [shape: s32[3], index: 0, kind: input, shape index: {}]
  %s1 = inlined_call_operand.vmem [shape: s32[3], index: 1, kind: input, shape index: {}, may-alias: {1,2}]
  %s2 = inlined_call_operand.vmem [shape: s32[3], index: 2, kind: input, shape index: {}, may-alias: {1,2}]
  %s3 = inlined_call_operand.vmem [shape: f32[2,8,256], index: 3, kind: input, shape index: {}]
  %s4 = inlined_call_operand.vmem [shape: f32[2,8,256], index: 4, kind: input, shape index: {}]
  %s5 = inlined_call_operand.vmem [shape: f32[2,17,256], index: 5, kind: output, shape index: {}]
  %s6 = sld [smem:[#allocation0]]
  $region68: #{model_forward.1} parent=0
    _
  %s8 = ssub.s32 1, %s6
  %s9 = scalar_select 0, %s8, %s6
  %s10 = sshll.u32 %s0, 4
  %s11 = int_to_ptr.vmem [resolvable:$true] %s10
  %13 = dma.vmem_to_smem %s11, 16, [#allocation3], [#allocation2]
  %s14 = sshll.u32 %s1, 4
  %s15 = int_to_ptr.vmem [resolvable:$true] %s14
  %17 = dma.vmem_to_smem %s15, 16, [#allocation4], [#allocation2]
  %s18 = sshll.u32 %s2, 4
  %s19 = int_to_ptr.vmem [resolvable:$true] %s18
  %21 = dma.vmem_to_smem %s19, 16, [#allocation5], [#allocation2]
  %22 = dma.done [#allocation2], 48
  %23 = sfence
  $region1: #{model_forward.1} parent=0
    #allocation6 [shape = 'u8[32768]{0}', space=vmem, size = 0x8000, scoped, tag = 'output window, operand 0']
    loop: start=0, step=1, limit=5
    $region2: #{model_forward.1} parent=1 // loop_pre_header
      _
    $region3: #{model_forward.1} parent=1 // loop_header
      %s25 = sphi 0, %s29
      %p26 = scmp.ge.s32.totalorder %s25, 5
      %s32 = sphi 0, %s44
      %s33 = sphi 0, %s40
      %s34 = sphi 0, %s32
      %s35 = sphi 0, %s33
      %s36 = sphi 0, %s34
      %s37 = sphi 0, %s35
      %s51 = sphi 0, %s53
      %s54 = sphi 0, %s51
      %s55 = sphi 0, %s54
      %s71 = sphi 0, %s55
      %s81 = sphi 0, %s83
      %s84 = sphi 0, %s81
      %s85 = sphi 0, %s84
      %s101 = sphi 0, %s85
      %s111 = sphi 0, %s113
      %s114 = sphi 0, %s111
      %s115 = sphi 0, %s114
      %s131 = sphi 0, %s115
    $region4: #{model_forward.1} parent=1 // loop_header_branch
      %28 = sbr.rel (%p26) target = $region8
    $region5: #{model_forward.1} parent=1 // loop_body
      %s30 = ssub.s32 %s25, 1
      %s31 = ssub.s32 %s25, 2
      %s38 = sadd.s32 1, %s33
      %p39 = scmp.ge.s32.totalorder %s38, 3
      %s40 = scalar_select %p39, 0, %s38
      %s41 = sadd.s32 1, %s32
      %s42 = scalar_select %p39, %s41, %s32
      %p43 = scmp.ge.s32.totalorder %s42, 1
      %s44 = scalar_select %p43, 0, %s42
      %s45 = sld [smem:[#allocation4 + %s33]]
      %s46 = sld [smem:[#allocation4 + %s40]]
      %s47 = ssub.s32 %s32, %s44
      %s48 = ssub.s32 %s45, %s46
      %s49 = sor.u32 %s47, %s48
      %p50 = scmp.eq.s32.totalorder %s49, 0
      %s52 = sadd.s32 %s51, 1
      %s53 = scalar_select %p50, %s51, %s52
      %p56 = pneg %p50
      %p57 = scmp.eq.s32.totalorder %s25, 2
      %p58 = por %p56, %p57
      %p59 = scmp.ne.s32.totalorder %s51, %s54
      %p60 = scmp.eq.s32.totalorder %s25, 0
      %p61 = por %p59, %p60
      %p62 = scmp.ne.s32.totalorder %s51, %s54
      %p63 = scmp.eq.s32.totalorder %s30, 2
      %p64 = por %p62, %p63
      %p65 = scmp.ne.s32.totalorder %s54, %s55
      %p66 = scmp.eq.s32.totalorder %s30, 0
      %p67 = por %p65, %p66
      %p68 = scmp.ne.s32.totalorder %s54, %s55
      %p69 = scmp.eq.s32.totalorder %s31, 2
      %p70 = por %p68, %p69
      %p72 = scmp.ne.s32.totalorder %s55, %s71
      %p73 = scmp.eq.s32.totalorder %s31, 0
      %p74 = por %p72, %p73
      %s75 = sld [smem:[#allocation5 + %s33]]
      %s76 = sld [smem:[#allocation5 + %s40]]
      %s77 = ssub.s32 %s32, %s44
      %s78 = ssub.s32 %s75, %s76
      %s79 = sor.u32 %s77, %s78
      %p80 = scmp.eq.s32.totalorder %s79, 0
      %s82 = sadd.s32 %s81, 1
      %s83 = scalar_select %p80, %s81, %s82
      %p86 = pneg %p80
      %p87 = scmp.eq.s32.totalorder %s25, 2
      %p88 = por %p86, %p87
      %p89 = scmp.ne.s32.totalorder %s81, %s84
      %p90 = scmp.eq.s32.totalorder %s25, 0
      %p91 = por %p89, %p90
      %p92 = scmp.ne.s32.totalorder %s81, %s84
      %p93 = scmp.eq.s32.totalorder %s30, 2
      %p94 = por %p92, %p93
      %p95 = scmp.ne.s32.totalorder %s84, %s85
      %p96 = scmp.eq.s32.totalorder %s30, 0
      %p97 = por %p95, %p96
      %p98 = scmp.ne.s32.totalorder %s84, %s85
      %p99 = scmp.eq.s32.totalorder %s31, 2
      %p100 = por %p98, %p99
      %p102 = scmp.ne.s32.totalorder %s85, %s101
      %p103 = scmp.eq.s32.totalorder %s31, 0
      %p104 = por %p102, %p103
      %s105 = sld [smem:[#allocation3 + %s33]]
      %s106 = sld [smem:[#allocation3 + %s40]]
      %s107 = ssub.s32 %s32, %s44
      %s108 = ssub.s32 %s105, %s106
      %s109 = sor.u32 %s107, %s108
      %p110 = scmp.eq.s32.totalorder %s109, 0
      %s112 = sadd.s32 %s111, 1
      %s113 = scalar_select %p110, %s111, %s112
      %p116 = pneg %p110
      %p117 = scmp.eq.s32.totalorder %s25, 2
      %p118 = por %p116, %p117
      %p119 = scmp.ne.s32.totalorder %s111, %s114
      %p120 = scmp.eq.s32.totalorder %s25, 0
      %p121 = por %p119, %p120
      %p122 = scmp.ne.s32.totalorder %s111, %s114
      %p123 = scmp.eq.s32.totalorder %s30, 2
      %p124 = por %p122, %p123
      %p125 = scmp.ne.s32.totalorder %s114, %s115
      %p126 = scmp.eq.s32.totalorder %s30, 0
      %p127 = por %p125, %p126
      %p128 = scmp.ne.s32.totalorder %s114, %s115
      %p129 = scmp.eq.s32.totalorder %s31, 2
      %p130 = por %p128, %p129
      %p132 = scmp.ne.s32.totalorder %s115, %s131
      %p133 = scmp.eq.s32.totalorder %s31, 0
      %p134 = por %p132, %p133
      %p135 = scmp.le.s32.totalorder 1, %s25
      %p136 = scmp.lt.s32.totalorder %s25, 4
      %p137 = pnand %p135, %p136
      %p138 = pneg %p137
      // Predicated region
      $region9: #{model_forward.1} parent=5 // pred_check
        _
      $region10: #{model_forward.1} parent=5 // pred_check_branch
        %140 = sbr.rel (%p137) target = $region12
      $region11: #{model_forward.1} parent=5 // pred_region
        %s141 = ssub.s32 %s25, 1
      $region12: #{model_forward.1} parent=5 // pred_fallthru
        _
      %p142 = scmp.lt.s32.totalorder %s25, 3
      // Predicated region
      $region13: #{model_forward.1} parent=5 // pred_check
        %p143 = pneg %p142
      $region14: #{model_forward.1} parent=5 // pred_check_branch
        %145 = sbr.rel (%p143) target = $region16
      $region15: #{model_forward.1} parent=5 // pred_region
        // Predicated region
        $region17: #{model_forward.1} parent=15 // pred_check
          %p146 = pneg %p61
        $region18: #{model_forward.1} parent=15 // pred_check_branch
          %148 = sbr.rel (%p146) target = $region20
        $region19: #{model_forward.1} parent=15 // pred_region
          %s149 = sld [smem:[#allocation4 + %s33]]
          %s150 = smul.u32 2, %s32
          %p151 = scmp.lt.s32.totalorder %s150, 1
          %s152 = scalar_select %p151, %s150, 1
          %p153 = scmp.lt.s32.totalorder %s149, 0
          %s154 = scalar_select %p153, %s149, 0
          %s155 = smul.addr %s154, 2
          %s156 = smul.addr %s152, 2
          %s157 = sadd.s32 %s155, %s156
          %s158 = smul.addr %s157, 8
          %s159 = scalar_lea.vmem %s3, %s158
          %s160 = sld [smem:[#allocation4 + %s33]]
          %s161 = smul.u32 2, %s32
        $region20: #{model_forward.1} parent=15 // pred_fallthru
          _
        // Predicated region
        $region21: #{model_forward.1} parent=15 // pred_check
          %p162 = pneg %p91
        $region22: #{model_forward.1} parent=15 // pred_check_branch
          %164 = sbr.rel (%p162) target = $region24
        $region23: #{model_forward.1} parent=15 // pred_region
          %s165 = sld [smem:[#allocation5 + %s33]]
          %s166 = smul.u32 2, %s32
          %p167 = scmp.lt.s32.totalorder %s166, 1
          %s168 = scalar_select %p167, %s166, 1
          %p169 = scmp.lt.s32.totalorder %s165, 0
          %s170 = scalar_select %p169, %s165, 0
          %s171 = smul.addr %s170, 2
          %s172 = smul.addr %s168, 2
          %s173 = sadd.s32 %s171, %s172
          %s174 = smul.addr %s173, 8
          %s175 = scalar_lea.vmem %s4, %s174
          %s176 = sld [smem:[#allocation5 + %s33]]
          %s177 = smul.u32 2, %s32
        $region24: #{model_forward.1} parent=15 // pred_fallthru
          _
      $region16: #{model_forward.1} parent=5 // pred_fallthru
        _
      %p178 = scmp.le.s32.totalorder 1, %s25
      %p179 = scmp.lt.s32.totalorder %s25, 4
      %p180 = pnand %p178, %p179
      %p181 = pneg %p180
      // Predicated region
      $region25: #{model_forward.1} parent=5 // pred_check
        _
      $region26: #{model_forward.1} parent=5 // pred_check_branch
        %183 = sbr.rel (%p180) target = $region28
      $region27: #{model_forward.1} parent=5 // pred_region
        %s184 = ssub.s32 %s25, 1
        %s185 = sld [smem:[#allocation4 + %s35]]
        %s186 = smul.u32 2, %s34
        %p187 = scmp.lt.s32.totalorder %s186, 1
        %s188 = scalar_select %p187, %s186, 1
        %p189 = scmp.lt.s32.totalorder %s185, 0
        %s190 = scalar_select %p189, %s185, 0
        %s191 = smul.addr %s190, 2
        %s192 = smul.addr %s188, 2
        %s193 = sadd.s32 %s191, %s192
        %s194 = smul.addr %s193, 8
        %s195 = scalar_lea.vmem %s3, %s194
        %p196 = pneg %p67
        %p197 = pneg %p64
        %s198 = sld [smem:[#allocation5 + %s35]]
        %s199 = smul.u32 2, %s34
        %p200 = scmp.lt.s32.totalorder %s199, 1
        %s201 = scalar_select %p200, %s199, 1
        %p202 = scmp.lt.s32.totalorder %s198, 0
        %s203 = scalar_select %p202, %s198, 0
        %s204 = smul.addr %s203, 2
        %s205 = smul.addr %s201, 2
        %s206 = sadd.s32 %s204, %s205
        %s207 = smul.addr %s206, 8
        %s208 = scalar_lea.vmem %s4, %s207
        %p209 = pneg %p97
        %p210 = pneg %p94
        %p211 = pneg %p127
        %p212 = pneg %p124
        %s213 = sand.u32 %s114, 1
        %s214 = sand.u32 %s114, 1
        %s215 = smul.addr %s214, 32
        %s216 = scalar_lea.vmem [#allocation6], %s215
        %s217 = sld [smem:[#allocation4 + %s35]]
        %s218 = smul.u32 2, %s34
        %p219 = scmp.lt.s32.totalorder %s218, 1
        %s220 = scalar_select %p219, %s218, 1
        %p221 = scmp.lt.s32.totalorder %s217, 0
        %s222 = scalar_select %p221, %s217, 0
        %s223 = smul.addr %s222, 2
        %s224 = smul.addr %s220, 2
        %s225 = sadd.s32 %s223, %s224
        %s226 = smul.addr %s225, 8
        %s227 = scalar_lea.vmem %s3, %s226
        %s228 = sld [smem:[#allocation4 + %s35]]
        %s229 = smul.u32 2, %s34
        %s230 = sld [smem:[#allocation5 + %s35]]
        %s231 = smul.u32 2, %s34
        %p232 = scmp.lt.s32.totalorder %s231, 1
        %s233 = scalar_select %p232, %s231, 1
        %p234 = scmp.lt.s32.totalorder %s230, 0
        %s235 = scalar_select %p234, %s230, 0
        %s236 = smul.addr %s235, 2
        %s237 = smul.addr %s233, 2
        %s238 = sadd.s32 %s236, %s237
        %s239 = smul.addr %s238, 8
        %s240 = scalar_lea.vmem %s4, %s239
        %s241 = sld [smem:[#allocation5 + %s35]]
        %s242 = smul.u32 2, %s34
        %s243 = sld [smem:[#allocation3 + %s35]]
        %s244 = smul.u32 2, %s34
        %p245 = scmp.le.s32.totalorder %s35, 1
        // Predicated region
        $region29: #{model_forward.1} parent=27 // pred_check
          %p246 = pneg %p245
        $region30: #{model_forward.1} parent=27 // pred_check_branch
          %248 = sbr.rel (%p246) target = $region32
        $region31: #{model_forward.1} parent=27 // pred_region
          %v249 = vld [vmem:[%s227] sm:$0xff]
          %v250 = vld [vmem:[%s227 + $0x8] sm:$0xff]
          %v251 = vld [vmem:[%s227 + $0x10] sm:$0xff]
          %v252 = vld [vmem:[%s227 + $0x18] sm:$0xff]
          %v253 = vmax.f32 %v249, 0.0
          %v254 = vmax.f32 %v250, 0.0
          %v255 = vmax.f32 %v251, 0.0
          %v256 = vmax.f32 %v252, 0.0
          %v257 = vmin.f32 %v253, 6.0
          %v258 = vmin.f32 %v254, 6.0
          %v259 = vmin.f32 %v255, 6.0
          %v260 = vmin.f32 %v256, 6.0
          %261 = vst [vmem:[%s216] sm:$0xff] %v257
          %262 = vst [vmem:[%s216 + $0x8] sm:$0xff] %v258
          %263 = vst [vmem:[%s216 + $0x10] sm:$0xff] %v259
          %264 = vst [vmem:[%s216 + $0x18] sm:$0xff] %v260
        $region32: #{model_forward.1} parent=27 // pred_fallthru
          _
        %p265 = scmp.gt.s32.totalorder %s35, 1
        // Predicated region
        $region33: #{model_forward.1} parent=27 // pred_check
          %p266 = pneg %p265
        $region34: #{model_forward.1} parent=27 // pred_check_branch
          %268 = sbr.rel (%p266) target = $region36
        $region35: #{model_forward.1} parent=27 // pred_region
          %v269 = vld [vmem:[%s240] sm:$0xff]
          %v270 = vld [vmem:[%s240 + $0x8] sm:$0xff]
          %v271 = vld [vmem:[%s240 + $0x10] sm:$0xff]
          %v272 = vld [vmem:[%s240 + $0x18] sm:$0xff]
          %v273 = vmax.f32 %v269, 0.0
          %v274 = vmax.f32 %v270, 0.0
          %v275 = vmax.f32 %v271, 0.0
          %v276 = vmax.f32 %v272, 0.0
          %v277 = vmin.f32 %v273, 6.0
          %v278 = vmin.f32 %v274, 6.0
          %v279 = vmin.f32 %v275, 6.0
          %v280 = vmin.f32 %v276, 6.0
          %281 = vst [vmem:[%s216] sm:$0xff] %v277
          %282 = vst [vmem:[%s216 + $0x8] sm:$0xff] %v278
          %283 = vst [vmem:[%s216 + $0x10] sm:$0xff] %v279
          %284 = vst [vmem:[%s216 + $0x18] sm:$0xff] %v280
        $region36: #{model_forward.1} parent=27 // pred_fallthru
          _
        %s285 = sand.u32 %s114, 1
        %s286 = sand.u32 %s114, 1
        %s287 = smul.addr %s286, 32
        %s288 = scalar_lea.vmem [#allocation6], %s287
        // Predicated region
        $region37: #{model_forward.1} parent=27 // pred_check
          %p289 = pneg %p124
        $region38: #{model_forward.1} parent=27 // pred_check_branch
          %291 = sbr.rel (%p289) target = $region40
        $region39: #{model_forward.1} parent=27 // pred_region
          %s292 = sld [smem:[#allocation3 + %s35]]
          %s293 = smul.u32 2, %s34
          %s294 = smul.addr %s292, 2
          %s295 = smul.addr %s293, 6
          %s296 = sadd.s32 %s294, %s295
          %s297 = smul.addr %s296, 8
          %s298 = scalar_lea.vmem %s5, %s297
          // Predicated region
          $region41: #{model_forward.1} parent=39 // pred_check
            _
          $region42: #{model_forward.1} parent=39 // pred_check_branch
            %300 = sbr.rel (0) target = $region44
          $region43: #{model_forward.1} parent=39 // pred_region
            // Predicated region
            $region45: #{model_forward.1} parent=43 // pred_check
              _
            $region46: #{model_forward.1} parent=43 // pred_check_branch
              %302 = sbr.rel (0) target = $region48
            $region47: #{model_forward.1} parent=43 // pred_region
              loop: start=0, step=1, limit=1
              $region49: #{model_forward.1} parent=47 // loop_pre_header
                _
              $region50: #{model_forward.1} parent=47 // loop_header
                %s304 = sphi 0, %s308
                %p305 = scmp.ge.s32.totalorder %s304, 1
                %s309 = sphi %s288, %s288
                %s310 = sphi %s298, %s298
              $region51: #{model_forward.1} parent=47 // loop_header_branch
                %307 = sbr.rel (%p305) target = $region55
              $region52: #{model_forward.1} parent=47 // loop_body
                %v311 = vld [vmem:[%s309] sm:$0xff]
                %312 = vst [vmem:[%s310] sm:$0xff] %v311
                %v313 = vld [vmem:[%s309 + $0x8] sm:$0xff]
                %314 = vst [vmem:[%s310 + $0x8] sm:$0xff] %v313
                %v315 = vld [vmem:[%s309 + $0x10] sm:$0xff]
                %316 = vst [vmem:[%s310 + $0x30] sm:$0xff] %v315
                %v317 = vld [vmem:[%s309 + $0x18] sm:$0xff]
                %318 = vst [vmem:[%s310 + $0x38] sm:$0xff] %v317
              $region53: #{model_forward.1} parent=47 // loop_footer
                %s308 = sadd.s32 1, %s304
              $region54: #{model_forward.1} parent=47 // loop_footer_branch
                %303 = sbr.rel target = $region50
              $region55: #{model_forward.1} parent=47 // loop_exit
                _
            $region48: #{model_forward.1} parent=43 // pred_fallthru
              _
            // Predicated region
            $region56: #{model_forward.1} parent=43 // pred_check
              _
            $region57: #{model_forward.1} parent=43 // pred_check_branch
              %320 = sbr.rel target = $region59
            $region58: #{model_forward.1} parent=43 // pred_region
              _
            $region59: #{model_forward.1} parent=43 // pred_fallthru
              _
          $region44: #{model_forward.1} parent=39 // pred_fallthru
            _
          %321 = vnop
        $region40: #{model_forward.1} parent=27 // pred_fallthru
          _
      $region28: #{model_forward.1} parent=5 // pred_fallthru
        _
      %p322 = scmp.le.s32.totalorder 2, %s25
      // Predicated region
      $region60: #{model_forward.1} parent=5 // pred_check
        %p323 = pneg %p322
      $region61: #{model_forward.1} parent=5 // pred_check_branch
        %325 = sbr.rel (%p323) target = $region63
      $region62: #{model_forward.1} parent=5 // pred_region
        %s326 = ssub.s32 %s25, 2
        // Predicated region
        $region64: #{model_forward.1} parent=62 // pred_check
          %p327 = pneg %p130
        $region65: #{model_forward.1} parent=62 // pred_check_branch
          %329 = sbr.rel (%p327) target = $region67
        $region66: #{model_forward.1} parent=62 // pred_region
          %s330 = sand.u32 %s115, 1
          %s331 = sand.u32 %s115, 1
          %s332 = smul.addr %s331, 32
          %s333 = scalar_lea.vmem [#allocation6], %s332
        $region67: #{model_forward.1} parent=62 // pred_fallthru
          _
      $region63: #{model_forward.1} parent=5 // pred_fallthru
        _
    $region6: #{model_forward.1} parent=1 // loop_footer
      %s29 = sadd.s32 1, %s25
    $region7: #{model_forward.1} parent=1 // loop_footer_branch
      %24 = sbr.rel target = $region3
    $region8: #{model_forward.1} parent=1 // loop_exit
      _

</llo_original>
